<compile_context>
chip_gen: v5e
topology: v5e:2x2
jax: 0.10.0
libtpu: 0.0.40
codegen_flags: <defaults>
</compile_context>

<pallas_src>
import jax
import jax.numpy as jnp
from jax.experimental import pallas as pl
from jax.experimental.pallas import tpu as pltpu


def _additive_attn_kernel(q_ref, k_ref, v_ref, wseg_ref, expand_ref, b_ref, o_ref):
    # q/k/v/o_ref : (T, L*D) lane-dense row blocks
    # wseg_ref    : (L*D, L) f32 block-diagonal Linear(D->1) weight
    # expand_ref  : (L, L*D) f32 0/1 matrix replicating alpha[:, l] across its D lanes
    # b_ref       : (1,) f32 in SMEM (Linear bias)
    q = q_ref[...].astype(jnp.float32)
    k = k_ref[...].astype(jnp.float32)

    # e = tanh((q + k) / 2): lane-dense VPU add/mul + EUP tanh.
    e = jnp.tanh((q + k) * 0.5)                                  # (T, L*D)

    # Linear(D -> 1) per (row, length) position: segmented D-reduction done as a
    # block-diagonal matmul on the MXU.
    scores = jnp.dot(e, wseg_ref[...],
                     preferred_element_type=jnp.float32)         # (T, L)
    scores = scores + b_ref[0]

    # TODO(synk): optional `mask` argument (masked_fill with -10000) not wired in;
    # the reference forward is reproduced for mask=None.

    # softmax over the length axis L.
    m = jnp.max(scores, axis=-1, keepdims=True)                  # (T, 1)
    p = jnp.exp(scores - m)                                      # (T, L)
    denom = jnp.sum(p, axis=-1, keepdims=True)                   # (T, 1)
    alpha = p * pl.reciprocal(denom, approx=True)                # (T, L)

    # Broadcast alpha[:, l] across its D lanes (tiny MXU matmul) so the final
    # multiply and store stay lane-dense.
    a_full = jnp.dot(alpha, expand_ref[...],
                     preferred_element_type=jnp.float32)         # (T, L*D)

    v = v_ref[...]
    o_ref[...] = (a_full.astype(v.dtype) * v).astype(o_ref.dtype)


def additive_attention(q, k, v, w, b, *, block_rows=None):
    """q, k, v: (B, H, L, D); w: (1, D); b: (1,). Returns (B, H, L, D)."""
    B, H, L, D = q.shape
    N = B * H
    LD = L * D

    # Fold heads into rows and (L, D) into a lane-dense last axis of L*D.
    qf = q.reshape(N, LD)
    kf = k.reshape(N, LD)
    vf = v.reshape(N, LD)

    w_vec = w.reshape(D).astype(jnp.float32)
    eye = jnp.eye(L, dtype=jnp.float32)
    # wseg[l*D + d, l'] = w[d] * (l == l')   ->  scores = e2d @ wseg
    wseg = (eye[:, None, :] * w_vec[None, :, None]).reshape(LD, L)
    # expand[l', l*D + d] = (l == l')        ->  a_full = alpha @ expand
    expand = jnp.broadcast_to(eye[:, :, None], (L, L, D)).reshape(L, LD)
    b1 = b.reshape(1).astype(jnp.float32)

    if block_rows is None:
        # Target ~1 MiB per input block so q+k+v+out, double-buffered, stay well
        # under the scoped VMEM limit on all generations (incl. v7x's 64 MiB).
        itemsize = jnp.dtype(q.dtype).itemsize
        block_rows = max(8, (1 << 20) // (LD * itemsize))
    T = min(N, block_rows)
    if T < N:
        T = max(8, (T // 8) * 8)  # keep the sublane block dim a multiple of 8
    grid = (pl.cdiv(N, T),)

    row_spec = pl.BlockSpec((T, LD), lambda i: (i, 0))
    out = pl.pallas_call(
        _additive_attn_kernel,
        out_shape=jax.ShapeDtypeStruct((N, LD), q.dtype),
        grid_spec=pltpu.PrefetchScalarGridSpec(
            num_scalar_prefetch=0,
            grid=grid,
            in_specs=[
                row_spec,                                          # q
                row_spec,                                          # k
                row_spec,                                          # v
                pl.BlockSpec((LD, L), lambda i: (0, 0)),           # wseg (revisited)
                pl.BlockSpec((L, LD), lambda i: (0, 0)),           # expand (revisited)
                pl.BlockSpec(memory_space=pltpu.MemorySpace.SMEM), # bias scalar
            ],
            out_specs=row_spec,
        ),
        compiler_params=pltpu.CompilerParams(
            dimension_semantics=("parallel",),
            vmem_limit_bytes=32 * 1024 * 1024,
        ),
    )(qf, kf, vf, wseg, expand, b1)
    return out.reshape(B, H, L, D)


def additive_attention_ref(q, k, v, w, b):
    e = jnp.tanh((q + k) * 0.5)
    scores = jnp.einsum("bhld,d->bhl", e, w[0]) + b[0]   # (B, H, L)
    alpha = jax.nn.softmax(scores, axis=-1)
    return alpha[..., None] * v


if __name__ == "__main__":
    B, H, L, D = 2, 4, 8, 32          # batch, heads, length, d_tensor
    key = jax.random.PRNGKey(0)
    kq, kk, kv, kw, kb = jax.random.split(key, 5)

    q = jax.random.normal(kq, (B, H, L, D), dtype=jnp.float32)
    k = jax.random.normal(kk, (B, H, L, D), dtype=jnp.float32)
    v = jax.random.normal(kv, (B, H, L, D), dtype=jnp.float32)

    # nn.Linear(d_tensor, 1): weight (1, D), bias (1,), uniform(-1/sqrt(D), 1/sqrt(D))
    bound = 1.0 / (D ** 0.5)
    w = jax.random.uniform(kw, (1, D), minval=-bound, maxval=bound, dtype=jnp.float32)
    b = jax.random.uniform(kb, (1,), minval=-bound, maxval=bound, dtype=jnp.float32)

    out = jax.block_until_ready(additive_attention(q, k, v, w, b))
    ref = additive_attention_ref(q, k, v, w, b)

    assert out.shape == (B, H, L, D)
    # Slightly loosened tolerance: EUP approx reciprocal + MXU reductions.
    assert jnp.allclose(out, ref, atol=5e-3, rtol=5e-3), float(jnp.max(jnp.abs(out - ref)))
    print("KERNEL_OK")
</pallas_src>

<mosaic_0001>
module attributes {stable_mosaic.version = 11 : i64} {
  func.func @_additive_attn_kernel(%arg0: i32, %arg1: memref<8x256xf32, #tpu.memory_space<vmem>>, %arg2: memref<8x256xf32, #tpu.memory_space<vmem>>, %arg3: memref<8x256xf32, #tpu.memory_space<vmem>>, %arg4: memref<256x8xf32, #tpu.memory_space<vmem>>, %arg5: memref<8x256xf32, #tpu.memory_space<vmem>>, %arg6: memref<1xf32, #tpu.memory_space<smem>>, %arg7: memref<8x256xf32, #tpu.memory_space<vmem>>) attributes {dimension_semantics = [#tpu.dimension_semantics<parallel>], iteration_bounds = array<i64: 1>, scalar_prefetch = 0 : i64, scratch_operands = 0 : i64, tpu.core_type = #tpu.core_type<tc>, window_params = [{transform_indices = @transform_0, window_bounds = array<i64: 8, 256>}, {transform_indices = @transform_1, window_bounds = array<i64: 8, 256>}, {transform_indices = @transform_2, window_bounds = array<i64: 8, 256>}, {pipeline_mode = #tpu.pipeline_mode<synchronous>, transform_indices = @transform_3, window_bounds = array<i64: 256, 8>}, {pipeline_mode = #tpu.pipeline_mode<synchronous>, transform_indices = @transform_4, window_bounds = array<i64: 8, 256>}, {transform_indices = @transform_5, window_bounds = array<i64: 1>}, {transform_indices = @transform_6, window_bounds = array<i64: 8, 256>}]} {
    %c0 = arith.constant 0 : index
    %c0_0 = arith.constant 0 : index
    %0 = vector.load %arg1[%c0, %c0_0] : memref<8x256xf32, #tpu.memory_space<vmem>>, vector<8x256xf32>
    %c0_1 = arith.constant 0 : index
    %c0_2 = arith.constant 0 : index
    %1 = vector.load %arg2[%c0_1, %c0_2] : memref<8x256xf32, #tpu.memory_space<vmem>>, vector<8x256xf32>
    %2 = arith.addf %0, %1 : vector<8x256xf32>
    %cst = arith.constant 5.000000e-01 : f32
    %3 = vector.broadcast %cst : f32 to vector<8x256xf32>
    %4 = arith.mulf %2, %3 : vector<8x256xf32>
    %5 = math.tanh %4 : vector<8x256xf32>
    %c0_3 = arith.constant 0 : index
    %c0_4 = arith.constant 0 : index
    %6 = vector.load %arg4[%c0_3, %c0_4] : memref<256x8xf32, #tpu.memory_space<vmem>>, vector<256x8xf32>
    %cst_5 = arith.constant dense<0.000000e+00> : vector<8x8xf32>
    %7 = tpu.matmul %5, %6, %cst_5 {dimension_numbers = #tpu.dot_dimension_numbers<[1], [0], [0], [1], [0, 0, 1, 1], [], []>} : vector<8x256xf32>, vector<256x8xf32>, vector<8x8xf32> -> vector<8x8xf32>
    %c0_6 = arith.constant 0 : index
    %8 = memref.load %arg6[%c0_6] : memref<1xf32, #tpu.memory_space<smem>>
    %9 = vector.broadcast %8 : f32 to vector<8x8xf32>
    %10 = arith.addf %7, %9 : vector<8x8xf32>
    %cst_7 = arith.constant dense<0xFF800000> : vector<8xf32>
    %11 = vector.multi_reduction <maximumf>, %10, %cst_7 [1] : vector<8x8xf32> to vector<8xf32>
    %12 = vector.shape_cast %11 : vector<8xf32> to vector<8x1xf32>
    %13 = vector.broadcast %12 : vector<8x1xf32> to vector<8x8xf32>
    %14 = arith.subf %10, %13 : vector<8x8xf32>
    %15 = math.exp %14 : vector<8x8xf32>
    %cst_8 = arith.constant dense<0.000000e+00> : vector<8xf32>
    %16 = vector.multi_reduction <add>, %15, %cst_8 [1] : vector<8x8xf32> to vector<8xf32>
    %17 = vector.shape_cast %16 : vector<8xf32> to vector<8x1xf32>
    %18 = tpu.reciprocal %17 {approx = true} : vector<8x1xf32> -> vector<8x1xf32>
    %19 = vector.broadcast %18 : vector<8x1xf32> to vector<8x8xf32>
    %20 = arith.mulf %15, %19 : vector<8x8xf32>
    %c0_9 = arith.constant 0 : index
    %c0_10 = arith.constant 0 : index
    %21 = vector.load %arg5[%c0_9, %c0_10] : memref<8x256xf32, #tpu.memory_space<vmem>>, vector<8x256xf32>
    %cst_11 = arith.constant dense<0.000000e+00> : vector<8x256xf32>
    %22 = tpu.matmul %20, %21, %cst_11 {dimension_numbers = #tpu.dot_dimension_numbers<[1], [0], [0], [1], [0, 0, 1, 1], [], []>} : vector<8x8xf32>, vector<8x256xf32>, vector<8x256xf32> -> vector<8x256xf32>
    %c0_12 = arith.constant 0 : index
    %c0_13 = arith.constant 0 : index
    %23 = vector.load %arg3[%c0_12, %c0_13] : memref<8x256xf32, #tpu.memory_space<vmem>>, vector<8x256xf32>
    %24 = arith.mulf %22, %23 : vector<8x256xf32>
    %c0_14 = arith.constant 0 : index
    %c0_15 = arith.constant 0 : index
    %25 = vector.load %arg7[%c0_14, %c0_15] : memref<8x256xf32, #tpu.memory_space<vmem>>, vector<8x256xf32>
    tpu.vector_store %arg7[%c0_14, %c0_15], %24 {strides = array<i32>} : memref<8x256xf32, #tpu.memory_space<vmem>>, vector<8x256xf32>,
    return
  }
  func.func @transform_0(%arg0: i32) -> (i32, i32) {
    %c0_i32 = arith.constant 0 : i32
    %c0_i32_0 = arith.constant 0 : i32
    return %arg0, %c0_i32 : i32, i32
  }
  func.func @transform_1(%arg0: i32) -> (i32, i32) {
    %c0_i32 = arith.constant 0 : i32
    %c0_i32_0 = arith.constant 0 : i32
    return %arg0, %c0_i32 : i32, i32
  }
  func.func @transform_2(%arg0: i32) -> (i32, i32) {
    %c0_i32 = arith.constant 0 : i32
    %c0_i32_0 = arith.constant 0 : i32
    return %arg0, %c0_i32 : i32, i32
  }
  func.func @transform_3(%arg0: i32) -> (i32, i32) {
    %c0_i32 = arith.constant 0 : i32
    %c0_i32_0 = arith.constant 0 : i32
    %c0_i32_1 = arith.constant 0 : i32
    return %c0_i32, %c0_i32_0 : i32, i32
  }
  func.func @transform_4(%arg0: i32) -> (i32, i32) {
    %c0_i32 = arith.constant 0 : i32
    %c0_i32_0 = arith.constant 0 : i32
    %c0_i32_1 = arith.constant 0 : i32
    return %c0_i32, %c0_i32_0 : i32, i32
  }
  func.func @transform_5(%arg0: i32) -> i32 {
    %c0_i32 = arith.constant 0 : i32
    %c0_i32_0 = arith.constant 0 : i32
    return %c0_i32 : i32
  }
  func.func @transform_6(%arg0: i32) -> (i32, i32) {
    %c0_i32 = arith.constant 0 : i32
    %c0_i32_0 = arith.constant 0 : i32
    return %arg0, %c0_i32 : i32, i32
  }
}

</mosaic_0001>

<llo_original>
// kernel: tpu_custom_call.1
$region0: #{tpu_custom_call.1}
  #allocation0 [shape = 'u32[]', space=smem, size = 0x4, offset = 0x4, fixed_abs, tag = 'smem constant byte address 0x4 - core index']
  #allocation1 [shape = 'u32[72,128]{1,0:T(1,128)}', space=vmem, size = 0x9000, scoped, tag = 'internal scratch']
  #allocation2 [shape = 'f32[1]{0:T(128)S(6)}', space=smem, size = 0x200, scoped, tag = 'scoped memory for tpu_custom_call.1']
  %s0 = inlined_call_operand.vmem [shape: f32[8,256], index: 0, kind: input, shape index: {}]
  %s1 = inlined_call_operand.vmem [shape: f32[8,256], index: 1, kind: input, shape index: {}]
  %s2 = inlined_call_operand.vmem [shape: f32[8,256], index: 2, kind: input, shape index: {}]
  %s3 = inlined_call_operand.vmem [shape: f32[256,8], index: 3, kind: input, shape index: {}]
  %s4 = inlined_call_operand.vmem [shape: f32[8,256], index: 4, kind: input, shape index: {}]
  %s5 = inlined_call_operand.<no memory space> [shape: f32[1], index: 5, kind: input, shape index: {}]
  %s6 = inlined_call_operand.hbm [shape: f32[8,256], index: 6, kind: output, shape index: {}]
  %s7 = sld [smem:[#allocation0]]
  $region34: #{tpu_custom_call.1} parent=0
    _
  %s9 = ssub.s32 1, %s7
  %s10 = scalar_select 0, %s9, %s7
  %11 = sst [smem:[#allocation2]] %s5
  $region1: #{tpu_custom_call.1} parent=0
    #allocation3 [shape = 'u8[8192]{0}', space=vmem, size = 0x2000, scoped, tag = 'output window, operand 0, single buffered']
    #allocation4 [shape = 's32[1]{0}', space=sflag, size = 0x4, scoped, tag = 'scoped memory for tpu_custom_call.1']
    %12 = vsyncpa [#allocation4], 0
    // Predicated region
    $region2: #{tpu_custom_call.1} parent=1 // pred_check
      _
    $region3: #{tpu_custom_call.1} parent=1 // pred_check_branch
      %14 = sbr.rel (0) target = $region5
    $region4: #{tpu_custom_call.1} parent=1 // pred_region
      _
    $region5: #{tpu_custom_call.1} parent=1 // pred_fallthru
      _
    // Predicated region
    $region6: #{tpu_custom_call.1} parent=1 // pred_check
      _
    $region7: #{tpu_custom_call.1} parent=1 // pred_check_branch
      %16 = sbr.rel (0) target = $region9
    $region8: #{tpu_custom_call.1} parent=1 // pred_region
      _
    $region9: #{tpu_custom_call.1} parent=1 // pred_fallthru
      _
    // Predicated region
    $region10: #{tpu_custom_call.1} parent=1 // pred_check
      _
    $region11: #{tpu_custom_call.1} parent=1 // pred_check_branch
      %18 = sbr.rel (0) target = $region13
    $region12: #{tpu_custom_call.1} parent=1 // pred_region
      _
    $region13: #{tpu_custom_call.1} parent=1 // pred_fallthru
      _
    // Predicated region
    $region14: #{tpu_custom_call.1} parent=1 // pred_check
      _
    $region15: #{tpu_custom_call.1} parent=1 // pred_check_branch
      %20 = sbr.rel (0) target = $region17
    $region16: #{tpu_custom_call.1} parent=1 // pred_region
      _
    $region17: #{tpu_custom_call.1} parent=1 // pred_fallthru
      _
    // Predicated region
    $region18: #{tpu_custom_call.1} parent=1 // pred_check
      _
    $region19: #{tpu_custom_call.1} parent=1 // pred_check_branch
      %22 = sbr.rel (0) target = $region21
    $region20: #{tpu_custom_call.1} parent=1 // pred_region
      _
    $region21: #{tpu_custom_call.1} parent=1 // pred_fallthru
      _
    // Predicated region
    $region22: #{tpu_custom_call.1} parent=1 // pred_check
      _
    $region23: #{tpu_custom_call.1} parent=1 // pred_check_branch
      %24 = sbr.rel (0) target = $region25
    $region24: #{tpu_custom_call.1} parent=1 // pred_region
      _
    $region25: #{tpu_custom_call.1} parent=1 // pred_fallthru
      _
    %v25 = vld [vmem:[%s0] sm:$0xff]
    %v26 = vld [vmem:[%s0 + $0x8] sm:$0xff]
    %v27 = vld [vmem:[%s1] sm:$0xff]
    %v28 = vld [vmem:[%s1 + $0x8] sm:$0xff]
    %v29 = vadd.f32 %v25, %v27
    %v30 = vadd.f32 %v26, %v28
    %v31 = vmul.f32 %v29, 0.5
    %v32 = vmul.f32 %v30, 0.5
    %v33 = vtanh.pop %v31
    %v34 = vtanh.pop %v32
    %v35 = vld [vmem:[%s3] sm:$0xff]
    %v36 = vld [vmem:[%s3 + $0x8] sm:$0xff]
    %v37 = vld [vmem:[%s3 + $0x10] sm:$0xff]
    %v38 = vld [vmem:[%s3 + $0x18] sm:$0xff]
    %v39 = vld [vmem:[%s3 + $0x20] sm:$0xff]
    %v40 = vld [vmem:[%s3 + $0x28] sm:$0xff]
    %v41 = vld [vmem:[%s3 + $0x30] sm:$0xff]
    %v42 = vld [vmem:[%s3 + $0x38] sm:$0xff]
    %v43 = vld [vmem:[%s3 + $0x40] sm:$0xff]
    %v44 = vld [vmem:[%s3 + $0x48] sm:$0xff]
    %v45 = vld [vmem:[%s3 + $0x50] sm:$0xff]
    %v46 = vld [vmem:[%s3 + $0x58] sm:$0xff]
    %v47 = vld [vmem:[%s3 + $0x60] sm:$0xff]
    %v48 = vld [vmem:[%s3 + $0x68] sm:$0xff]
    %v49 = vld [vmem:[%s3 + $0x70] sm:$0xff]
    %v50 = vld [vmem:[%s3 + $0x78] sm:$0xff]
    %v51 = vld [vmem:[%s3 + $0x80] sm:$0xff]
    %v52 = vld [vmem:[%s3 + $0x88] sm:$0xff]
    %v53 = vld [vmem:[%s3 + $0x90] sm:$0xff]
    %v54 = vld [vmem:[%s3 + $0x98] sm:$0xff]
    %v55 = vld [vmem:[%s3 + $0xa0] sm:$0xff]
    %v56 = vld [vmem:[%s3 + $0xa8] sm:$0xff]
    %v57 = vld [vmem:[%s3 + $0xb0] sm:$0xff]
    %v58 = vld [vmem:[%s3 + $0xb8] sm:$0xff]
    %v59 = vld [vmem:[%s3 + $0xc0] sm:$0xff]
    %v60 = vld [vmem:[%s3 + $0xc8] sm:$0xff]
    %v61 = vld [vmem:[%s3 + $0xd0] sm:$0xff]
    %v62 = vld [vmem:[%s3 + $0xd8] sm:$0xff]
    %v63 = vld [vmem:[%s3 + $0xe0] sm:$0xff]
    %v64 = vld [vmem:[%s3 + $0xe8] sm:$0xff]
    %v65 = vld [vmem:[%s3 + $0xf0] sm:$0xff]
    %v66 = vld [vmem:[%s3 + $0xf8] sm:$0xff]
    %s67 = sld [smem:[#allocation2]]
    %v68 = vstv %s67
    %69 = vmatpush.msra.mxu0 %v50
    %70 = vmatpush.msra.mxu0 %v49
    %71 = vmatpush.msra.mxu0 %v48
    %72 = vmatpush.msra.mxu0 %v47
    %73 = vmatpush.msra.mxu0 %v46
    %74 = vmatpush.msra.mxu0 %v45
    %75 = vmatpush.msra.mxu0 %v44
    %76 = vmatpush.msra.mxu0 %v43
    %77 = vmatpush.msra.mxu0 %v42
    %78 = vmatpush.msra.mxu0 %v41
    %79 = vmatpush.msra.mxu0 %v40
    %80 = vmatpush.msra.mxu0 %v39
    %81 = vmatpush.msra.mxu0 %v38
    %82 = vmatpush.msra.mxu0 %v37
    %83 = vmatpush.msra.mxu0 %v36
    %84 = vmatpush.msra.mxu0 %v35
    %85 = vmatmul.f32.gmra.mxu0 %v33
    %v86 = vpop.f32.mrf.mxu0
    %v87 = vadd.f32 %v68, %v86
    %88 = vdwg.mxu0
    %89 = vmatpush.msra.mxu0 %v66
    %90 = vmatpush.msra.mxu0 %v65
    %91 = vmatpush.msra.mxu0 %v64
    %92 = vmatpush.msra.mxu0 %v63
    %93 = vmatpush.msra.mxu0 %v62
    %94 = vmatpush.msra.mxu0 %v61
    %95 = vmatpush.msra.mxu0 %v60
    %96 = vmatpush.msra.mxu0 %v59
    %97 = vmatpush.msra.mxu0 %v58
    %98 = vmatpush.msra.mxu0 %v57
    %99 = vmatpush.msra.mxu0 %v56
    %100 = vmatpush.msra.mxu0 %v55
    %101 = vmatpush.msra.mxu0 %v54
    %102 = vmatpush.msra.mxu0 %v53
    %103 = vmatpush.msra.mxu0 %v52
    %104 = vmatpush.msra.mxu0 %v51
    %105 = vmatmul.f32.gmra.mxu0 %v34
    %v106 = vpop.f32.mrf.mxu0
    %v107 = vadd.f32 %v87, %v106
    %108 = vdwg.mxu0
    %vm109 = vcmask 64512
    %v110 = vsel %vm109, %v107, -inf
    %111 = vmax.xlane.f32.xlu0 %v110
    %v112 = vpop.xlane.xlu0 %111
    %v113 = vsub.f32 %v107, %v112
    %v114 = vmul.f32 %v113, 1.442695
    %v115 = vpow.pop %v114
    %v116 = vsel %vm109, %v115, 0.0
    %117 = vadd.xlane.f32.xlu0 %v116
    %v118 = vpop.xlane.xlu0 %117
    %v119 = vrcp.pop %v118
    %v120 = vmul.f32 %v115, %v119
    %v121 = vld [vmem:[%s4] sm:$0xff]
    %v122 = vld [vmem:[%s4 + $0x8] sm:$0xff]
    %v124 = vsel %vm109, %v120, 0
    %126 = vmatpush.msra.mxu0 0.0
    %127 = vmatpush.msra.mxu0 0.0
    %128 = vmatpush.msra.mxu0 0.0
    %129 = vmatpush.msra.mxu0 0.0
    %130 = vmatpush.msra.mxu0 0.0
    %131 = vmatpush.msra.mxu0 0.0
    %132 = vmatpush.msra.mxu0 0.0
    %133 = vmatpush.msra.mxu0 0.0
    %134 = vmatpush.msra.mxu0 0.0
    %135 = vmatpush.msra.mxu0 0.0
    %136 = vmatpush.msra.mxu0 0.0
    %137 = vmatpush.msra.mxu0 0.0
    %138 = vmatpush.msra.mxu0 0.0
    %139 = vmatpush.msra.mxu0 0.0
    %140 = vmatpush.msra.mxu0 0.0
    %141 = vmatpush.msra.mxu0 %v121
    %142 = vmatmul.f32.gmra.mxu0 %v124
    %v143 = vpop.f32.mrf.mxu0
    %v144 = vadd.f32 0.0, %v143
    %145 = vdwg.mxu0
    %146 = vmatpush.msra.mxu0 0.0
    %147 = vmatpush.msra.mxu0 0.0
    %148 = vmatpush.msra.mxu0 0.0
    %149 = vmatpush.msra.mxu0 0.0
    %150 = vmatpush.msra.mxu0 0.0
    %151 = vmatpush.msra.mxu0 0.0
    %152 = vmatpush.msra.mxu0 0.0
    %153 = vmatpush.msra.mxu0 0.0
    %154 = vmatpush.msra.mxu0 0.0
    %155 = vmatpush.msra.mxu0 0.0
    %156 = vmatpush.msra.mxu0 0.0
    %157 = vmatpush.msra.mxu0 0.0
    %158 = vmatpush.msra.mxu0 0.0
    %159 = vmatpush.msra.mxu0 0.0
    %160 = vmatpush.msra.mxu0 0.0
    %161 = vmatpush.msra.mxu0 %v122
    %162 = vmatmul.f32.gmra.mxu0 %v124
    %v163 = vpop.f32.mrf.mxu0
    %v164 = vadd.f32 0.0, %v163
    %165 = vdwg.mxu0
    %v166 = vld [vmem:[%s2] sm:$0xff]
    %v167 = vld [vmem:[%s2 + $0x8] sm:$0xff]
    %v168 = vmul.f32 %v144, %v166
    %v169 = vmul.f32 %v164, %v167
    %170 = vst [vmem:[#allocation3] sm:$0xff] %v168
    %171 = vst [vmem:[#allocation3 + $0x8] sm:$0xff] %v169
    // Predicated region
    $region26: #{tpu_custom_call.1} parent=1 // pred_check
      _
    $region27: #{tpu_custom_call.1} parent=1 // pred_check_branch
      %173 = sbr.rel (0) target = $region29
    $region28: #{tpu_custom_call.1} parent=1 // pred_region
      %175 = vsyncadd [#allocation4], 0
      %s177 = sshll.u32 [#allocation3], 4
      %s178 = int_to_ptr.vmem [resolvable:$true] %s177
      %s179 = sshll.u32 %s6, 4
      %s180 = int_to_ptr.hbm [resolvable:$true] %s179
      %182 = dma.vmem_to_hbm [thread:$0]  %s178, 256, %s180, [#allocation4]
    $region29: #{tpu_custom_call.1} parent=1 // pred_fallthru
      _
    // Predicated region
    $region30: #{tpu_custom_call.1} parent=1 // pred_check
      _
    $region31: #{tpu_custom_call.1} parent=1 // pred_check_branch
      %184 = sbr.rel (0) target = $region33
    $region32: #{tpu_custom_call.1} parent=1 // pred_region
      %186 = dma.done [#allocation4], 256
    $region33: #{tpu_custom_call.1} parent=1 // pred_fallthru
      _
    %187 = vsyncpa [#allocation4], 1

</llo_original>
